<compile_context>
chip_gen: v7x
topology: tpu7x:2x2x1
jax: 0.10.0
libtpu: 0.0.40
codegen_flags: <defaults>
</compile_context>

<pallas_src>
import functools

import jax
import jax.numpy as jnp
from jax import lax
from jax.experimental import pallas as pl
from jax.experimental.pallas import tpu as pltpu

_NEG_INF = -1e30  # large finite negative; avoids inf/nan arithmetic in masking


def _round_up(x, m):
    return (x + m - 1) // m * m


def _autopool_kernel(alpha_ref, x_ref, out_ref, m_sc, num_sc, den_sc,
                     *, t_block, t_total, need_mask):
    # alpha_ref : (1, Cp)        f32, resident (constant block index)
    # x_ref     : (Bb, Tb, Cp)   one (batch, time) tile of `decision`
    # out_ref   : (Bb, 1, Cp)    resident across the time grid axis
    # m_sc/num_sc/den_sc : (Bb, 1, Cp) f32 online-softmax accumulators
    t = pl.program_id(1)

    @pl.when(t == 0)
    def _init():
        m_sc[...] = jnp.full_like(m_sc, _NEG_INF)
        num_sc[...] = jnp.zeros_like(num_sc)
        den_sc[...] = jnp.zeros_like(den_sc)

    x = x_ref[...].astype(jnp.float32)            # (Bb, Tb, Cp)
    a = alpha_ref[...]                            # (1, Cp), already f32
    scaled = x * a[:, None, :]                    # alpha * decision

    if need_mask:
        # Time axis was padded; exclude padded rows from the softmax.
        t_idx = t * t_block + lax.broadcasted_iota(jnp.int32, scaled.shape, 1)
        scaled = jnp.where(t_idx < t_total, scaled, _NEG_INF)

    # Online softmax update over the time axis.
    m_new = jnp.maximum(m_sc[...], jnp.max(scaled, axis=1, keepdims=True))
    corr = jnp.exp(m_sc[...] - m_new)             # rescale old accumulators
    e = jnp.exp(scaled - m_new)                   # one exp / element (EUP)
    num_sc[...] = corr * num_sc[...] + jnp.sum(x * e, axis=1, keepdims=True)
    den_sc[...] = corr * den_sc[...] + jnp.sum(e, axis=1, keepdims=True)
    m_sc[...] = m_new

    @pl.when(t == pl.num_programs(1) - 1)
    def _finalize():
        den = den_sc[...]
        r = pl.reciprocal(den, approx=True)       # cheap EUP vrcp
        r = r * (2.0 - den * r)                   # one Newton step -> ~f32 exact
        out_ref[...] = (num_sc[...] * r).astype(out_ref.dtype)


def auto_pool(decision, alpha, *, vmem_block_budget_bytes=6 * 1024 * 1024):
    """decision: (B, T, C); alpha: (C,). Returns (B, C) = softmax-pooled decision."""
    B, T, C = decision.shape

    # Lane-dense class axis, sublane-aligned time axis.
    Cp = _round_up(C, 128)
    Tp = _round_up(T, 8)
    itemsize = decision.dtype.itemsize
    row_bytes = Tp * Cp * itemsize                # one batch row, full time extent

    if row_bytes <= vmem_block_budget_bytes:
        Tb = Tp
        Bb = max(1, min(B, vmem_block_budget_bytes // row_bytes))
    else:
        # Long-sequence path: tile the time axis, accumulate across tiles.
        Bb = 1
        Tb = max(8, (vmem_block_budget_bytes // (Cp * itemsize)) // 8 * 8)
        Tp = _round_up(T, Tb)

    # Keep at least 2 batch blocks when possible so both TensorCores (v7x
    # megacore) get work on the "parallel" axis.
    if B > 1:
        Bb = min(Bb, -(-B // 2))

    nb = -(-B // Bb)
    nt = Tp // Tb
    B_pad = nb * Bb

    # Zero-pad inputs (pad classes are benign; padded time rows are masked in-kernel).
    x = decision
    pads = ((0, B_pad - B), (0, Tp - T), (0, Cp - C))
    if any(p[1] for p in pads):
        x = jnp.pad(x, pads)
    a2d = jnp.pad(alpha.astype(jnp.float32), (0, Cp - C)).reshape(1, Cp)

    kernel = functools.partial(
        _autopool_kernel, t_block=Tb, t_total=T, need_mask=(Tp != T))

    out = pl.pallas_call(
        kernel,
        out_shape=jax.ShapeDtypeStruct((B_pad, 1, Cp), decision.dtype),
        grid_spec=pltpu.PrefetchScalarGridSpec(
            num_scalar_prefetch=0,
            grid=(nb, nt),                         # reduction (time) axis last
            in_specs=[
                pl.BlockSpec((1, Cp), lambda b, t: (0, 0)),        # alpha (shared)
                pl.BlockSpec((Bb, Tb, Cp), lambda b, t: (b, t, 0)),  # decision tile
            ],
            out_specs=pl.BlockSpec((Bb, 1, Cp), lambda b, t: (b, 0, 0)),
            scratch_shapes=[pltpu.VMEM((Bb, 1, Cp), jnp.float32)] * 3,
        ),
        compiler_params=pltpu.CompilerParams(
            dimension_semantics=("parallel", "arbitrary"),
        ),
    )(a2d, x)

    return out[:B, 0, :C]


def auto_pool_ref(decision, alpha):
    scaled = alpha * decision                     # broadcast over last dim
    weight = jax.nn.softmax(scaled, axis=1)       # softmax over time (dim=1)
    return jnp.sum(decision * weight, axis=1)


if __name__ == "__main__":
    key = jax.random.PRNGKey(0)
    k1, k2 = jax.random.split(key)

    B, T, C = 2, 8, 10  # batch, time (pooldim=1), outputdim
    decision = jax.random.uniform(k1, (B, T, C), dtype=jnp.float32)
    # nn.Parameter(torch.ones(outputdim)); perturb a bit to exercise the broadcast.
    alpha = jnp.ones((C,), jnp.float32) + 0.1 * jax.random.normal(k2, (C,), jnp.float32)

    # TODO(synk): the `logits` argument of AutoPool.forward is unused by the module.
    out = auto_pool(decision, alpha)
    out = jax.block_until_ready(out)

    ref = auto_pool_ref(decision, alpha)
    assert out.shape == (B, C), out.shape
    assert jnp.allclose(out, ref, rtol=1e-5, atol=1e-5), (out, ref)

    print("KERNEL_OK")
</pallas_src>

<mosaic_0001>
module attributes {stable_mosaic.version = 11 : i64} {
  func.func @_autopool_kernel(%arg0: i32, %arg1: i32, %arg2: memref<1x128xf32, #tpu.memory_space<vmem>>, %arg3: memref<1x8x128xf32, #tpu.memory_space<vmem>>, %arg4: memref<1x1x128xf32, #tpu.memory_space<vmem>>, %arg5: memref<1x1x128xf32, #tpu.memory_space<vmem>>, %arg6: memref<1x1x128xf32, #tpu.memory_space<vmem>>, %arg7: memref<1x1x128xf32, #tpu.memory_space<vmem>>) attributes {dimension_semantics = [#tpu.dimension_semantics<parallel>, #tpu.dimension_semantics<arbitrary>], iteration_bounds = array<i64: 2, 1>, scalar_prefetch = 0 : i64, scratch_operands = 3 : i64, tpu.core_type = #tpu.core_type<tc>, window_params = [{pipeline_mode = #tpu.pipeline_mode<synchronous>, transform_indices = @transform_0, window_bounds = array<i64: 1, 128>}, {transform_indices = @transform_1, window_bounds = array<i64: 1, 8, 128>}, {transform_indices = @transform_2, window_bounds = array<i64: 1, 1, 128>}]} {
    %c0_i32 = arith.constant 0 : i32
    %0 = arith.cmpi eq, %arg1, %c0_i32 : i32
    %1 = arith.extui %0 : i1 to i32
    %c0_i32_0 = arith.constant 0 : i32
    %2 = arith.cmpi ne, %1, %c0_i32_0 : i32
    scf.if %2 {
      %cst_30 = arith.constant -1.000000e+30 : f32
      %35 = vector.broadcast %cst_30 : f32 to vector<1x1x128xf32>
      %c0_31 = arith.constant 0 : index
      %c0_32 = arith.constant 0 : index
      %c0_33 = arith.constant 0 : index
      %36 = vector.load %arg5[%c0_31, %c0_32, %c0_33] : memref<1x1x128xf32, #tpu.memory_space<vmem>>, vector<1x1x128xf32>
      tpu.vector_store %arg5[%c0_31, %c0_32, %c0_33], %35 {strides = array<i32>} : memref<1x1x128xf32, #tpu.memory_space<vmem>>, vector<1x1x128xf32>,
      %cst_34 = arith.constant 0.000000e+00 : f32
      %37 = vector.broadcast %cst_34 : f32 to vector<1x1x128xf32>
      %c0_35 = arith.constant 0 : index
      %c0_36 = arith.constant 0 : index
      %c0_37 = arith.constant 0 : index
      %38 = vector.load %arg6[%c0_35, %c0_36, %c0_37] : memref<1x1x128xf32, #tpu.memory_space<vmem>>, vector<1x1x128xf32>
      tpu.vector_store %arg6[%c0_35, %c0_36, %c0_37], %37 {strides = array<i32>} : memref<1x1x128xf32, #tpu.memory_space<vmem>>, vector<1x1x128xf32>,
      %cst_38 = arith.constant 0.000000e+00 : f32
      %39 = vector.broadcast %cst_38 : f32 to vector<1x1x128xf32>
      %c0_39 = arith.constant 0 : index
      %c0_40 = arith.constant 0 : index
      %c0_41 = arith.constant 0 : index
      %40 = vector.load %arg7[%c0_39, %c0_40, %c0_41] : memref<1x1x128xf32, #tpu.memory_space<vmem>>, vector<1x1x128xf32>
      tpu.vector_store %arg7[%c0_39, %c0_40, %c0_41], %39 {strides = array<i32>} : memref<1x1x128xf32, #tpu.memory_space<vmem>>, vector<1x1x128xf32>,
    } else {
    }
    %c0 = arith.constant 0 : index
    %c0_1 = arith.constant 0 : index
    %c0_2 = arith.constant 0 : index
    %3 = vector.load %arg3[%c0, %c0_1, %c0_2] : memref<1x8x128xf32, #tpu.memory_space<vmem>>, vector<1x8x128xf32>
    %c0_3 = arith.constant 0 : index
    %c0_4 = arith.constant 0 : index
    %4 = vector.load %arg2[%c0_3, %c0_4] : memref<1x128xf32, #tpu.memory_space<vmem>>, vector<1x128xf32>
    %5 = vector.shape_cast %4 : vector<1x128xf32> to vector<1x1x128xf32>
    %6 = vector.broadcast %5 : vector<1x1x128xf32> to vector<1x8x128xf32>
    %7 = arith.mulf %3, %6 : vector<1x8x128xf32>
    %c0_5 = arith.constant 0 : index
    %c0_6 = arith.constant 0 : index
    %c0_7 = arith.constant 0 : index
    %8 = vector.load %arg5[%c0_5, %c0_6, %c0_7] : memref<1x1x128xf32, #tpu.memory_space<vmem>>, vector<1x1x128xf32>
    %cst = arith.constant dense<0xFF800000> : vector<1x128xf32>
    %9 = vector.multi_reduction <maximumf>, %7, %cst [1] : vector<1x8x128xf32> to vector<1x128xf32>
    %10 = vector.shape_cast %9 : vector<1x128xf32> to vector<1x1x128xf32>
    %11 = arith.maximumf %8, %10 : vector<1x1x128xf32>
    %c0_8 = arith.constant 0 : index
    %c0_9 = arith.constant 0 : index
    %c0_10 = arith.constant 0 : index
    %12 = vector.load %arg5[%c0_8, %c0_9, %c0_10] : memref<1x1x128xf32, #tpu.memory_space<vmem>>, vector<1x1x128xf32>
    %13 = arith.subf %12, %11 : vector<1x1x128xf32>
    %14 = math.exp %13 : vector<1x1x128xf32>
    %15 = vector.broadcast %11 : vector<1x1x128xf32> to vector<1x8x128xf32>
    %16 = arith.subf %7, %15 : vector<1x8x128xf32>
    %17 = math.exp %16 : vector<1x8x128xf32>
    %c0_11 = arith.constant 0 : index
    %c0_12 = arith.constant 0 : index
    %c0_13 = arith.constant 0 : index
    %18 = vector.load %arg6[%c0_11, %c0_12, %c0_13] : memref<1x1x128xf32, #tpu.memory_space<vmem>>, vector<1x1x128xf32>
    %19 = arith.mulf %14, %18 : vector<1x1x128xf32>
    %20 = arith.mulf %3, %17 : vector<1x8x128xf32>
    %cst_14 = arith.constant dense<0.000000e+00> : vector<1x128xf32>
    %21 = vector.multi_reduction <add>, %20, %cst_14 [1] : vector<1x8x128xf32> to vector<1x128xf32>
    %22 = vector.shape_cast %21 : vector<1x128xf32> to vector<1x1x128xf32>
    %23 = arith.addf %19, %22 : vector<1x1x128xf32>
    %c0_15 = arith.constant 0 : index
    %c0_16 = arith.constant 0 : index
    %c0_17 = arith.constant 0 : index
    %24 = vector.load %arg6[%c0_15, %c0_16, %c0_17] : memref<1x1x128xf32, #tpu.memory_space<vmem>>, vector<1x1x128xf32>
    tpu.vector_store %arg6[%c0_15, %c0_16, %c0_17], %23 {strides = array<i32>} : memref<1x1x128xf32, #tpu.memory_space<vmem>>, vector<1x1x128xf32>,
    %c0_18 = arith.constant 0 : index
    %c0_19 = arith.constant 0 : index
    %c0_20 = arith.constant 0 : index
    %25 = vector.load %arg7[%c0_18, %c0_19, %c0_20] : memref<1x1x128xf32, #tpu.memory_space<vmem>>, vector<1x1x128xf32>
    %26 = arith.mulf %14, %25 : vector<1x1x128xf32>
    %cst_21 = arith.constant dense<0.000000e+00> : vector<1x128xf32>
    %27 = vector.multi_reduction <add>, %17, %cst_21 [1] : vector<1x8x128xf32> to vector<1x128xf32>
    %28 = vector.shape_cast %27 : vector<1x128xf32> to vector<1x1x128xf32>
    %29 = arith.addf %26, %28 : vector<1x1x128xf32>
    %c0_22 = arith.constant 0 : index
    %c0_23 = arith.constant 0 : index
    %c0_24 = arith.constant 0 : index
    %30 = vector.load %arg7[%c0_22, %c0_23, %c0_24] : memref<1x1x128xf32, #tpu.memory_space<vmem>>, vector<1x1x128xf32>
    tpu.vector_store %arg7[%c0_22, %c0_23, %c0_24], %29 {strides = array<i32>} : memref<1x1x128xf32, #tpu.memory_space<vmem>>, vector<1x1x128xf32>,
    %c0_25 = arith.constant 0 : index
    %c0_26 = arith.constant 0 : index
    %c0_27 = arith.constant 0 : index
    %31 = vector.load %arg5[%c0_25, %c0_26, %c0_27] : memref<1x1x128xf32, #tpu.memory_space<vmem>>, vector<1x1x128xf32>
    tpu.vector_store %arg5[%c0_25, %c0_26, %c0_27], %11 {strides = array<i32>} : memref<1x1x128xf32, #tpu.memory_space<vmem>>, vector<1x1x128xf32>,
    %c0_i32_28 = arith.constant 0 : i32
    %32 = arith.cmpi eq, %arg1, %c0_i32_28 : i32
    %33 = arith.extui %32 : i1 to i32
    %c0_i32_29 = arith.constant 0 : i32
    %34 = arith.cmpi ne, %33, %c0_i32_29 : i32
    scf.if %34 {
      %c0_30 = arith.constant 0 : index
      %c0_31 = arith.constant 0 : index
      %c0_32 = arith.constant 0 : index
      %35 = vector.load %arg7[%c0_30, %c0_31, %c0_32] : memref<1x1x128xf32, #tpu.memory_space<vmem>>, vector<1x1x128xf32>
      %36 = tpu.reciprocal %35 {approx = true} : vector<1x1x128xf32> -> vector<1x1x128xf32>
      %37 = arith.mulf %35, %36 : vector<1x1x128xf32>
      %cst_33 = arith.constant 2.000000e+00 : f32
      %38 = vector.broadcast %cst_33 : f32 to vector<1x1x128xf32>
      %39 = arith.subf %38, %37 : vector<1x1x128xf32>
      %40 = arith.mulf %36, %39 : vector<1x1x128xf32>
      %c0_34 = arith.constant 0 : index
      %c0_35 = arith.constant 0 : index
      %c0_36 = arith.constant 0 : index
      %41 = vector.load %arg6[%c0_34, %c0_35, %c0_36] : memref<1x1x128xf32, #tpu.memory_space<vmem>>, vector<1x1x128xf32>
      %42 = arith.mulf %41, %40 : vector<1x1x128xf32>
      %c0_37 = arith.constant 0 : index
      %c0_38 = arith.constant 0 : index
      %c0_39 = arith.constant 0 : index
      %43 = vector.load %arg4[%c0_37, %c0_38, %c0_39] : memref<1x1x128xf32, #tpu.memory_space<vmem>>, vector<1x1x128xf32>
      tpu.vector_store %arg4[%c0_37, %c0_38, %c0_39], %42 {strides = array<i32>} : memref<1x1x128xf32, #tpu.memory_space<vmem>>, vector<1x1x128xf32>,
    } else {
    }
    return
  }
  func.func @transform_0(%arg0: i32, %arg1: i32) -> (i32, i32) {
    %c0_i32 = arith.constant 0 : i32
    %c0_i32_0 = arith.constant 0 : i32
    %c0_i32_1 = arith.constant 0 : i32
    return %c0_i32, %c0_i32_0 : i32, i32
  }
  func.func @transform_1(%arg0: i32, %arg1: i32) -> (i32, i32, i32) {
    %c0_i32 = arith.constant 0 : i32
    %c0_i32_0 = arith.constant 0 : i32
    return %arg0, %arg1, %c0_i32 : i32, i32, i32
  }
  func.func @transform_2(%arg0: i32, %arg1: i32) -> (i32, i32, i32) {
    %c0_i32 = arith.constant 0 : i32
    %c0_i32_0 = arith.constant 0 : i32
    %c0_i32_1 = arith.constant 0 : i32
    return %arg0, %c0_i32, %c0_i32_0 : i32, i32, i32
  }
}

</mosaic_0001>

<llo_original>
// kernel: tpu_custom_call.1
$region0: #{tpu_custom_call.1}
  #allocation0 [shape = 'u32[]', space=smem, size = 0x4, offset = 0x4, fixed_abs, tag = 'smem constant byte address 0x4 - core index']
  #allocation1 [shape = 'u32[144,128]{1,0:T(1,128)}', space=vmem, size = 0x12000, scoped, tag = 'internal scratch']
  #allocation2 [shape = 'f32[1,1,128]{2,1,0:T(1,128)}', space=vmem, size = 0x200, scoped, tag = 'scratch operand']
  #allocation3 [shape = 'f32[1,1,128]{2,1,0:T(1,128)}', space=vmem, size = 0x200, scoped, tag = 'scratch operand']
  #allocation4 [shape = 'f32[1,1,128]{2,1,0:T(1,128)}', space=vmem, size = 0x200, scoped, tag = 'scratch operand']
  %s0 = inlined_call_operand.hbm [shape: f32[1,128], index: 0, kind: input, shape index: {}]
  %s1 = inlined_call_operand.hbm [shape: f32[2,8,128], index: 1, kind: input, shape index: {}]
  %s2 = inlined_call_operand.hbm [shape: f32[2,1,128], index: 2, kind: output, shape index: {}]
  %s3 = sld [smem:[#allocation0]]
  $region57: #{tpu_custom_call.1} parent=0
    _
  %s5 = ssub.s32 1, %s3
  %s6 = scalar_select 0, %s5, %s3
  $region1: #{tpu_custom_call.1} parent=0
    #allocation5 [shape = 'u8[512]{0}', space=vmem, size = 0x400, scoped, tag = 'input window, operand 0, single buffered']
    #allocation6 [shape = 's32[2]{0}', space=sflag, size = 0x8, scoped, tag = 'scoped memory for tpu_custom_call.1']
    #allocation7 [shape = 's32[2]{0}', space=sflag, size = 0x8, scoped, tag = 'scoped memory for tpu_custom_call.1']
    #allocation8 [shape = 'u8[8192]{0}', space=vmem, size = 0x2000, scoped, tag = 'input window, operand 1']
    #allocation9 [shape = 's32[2]{0}', space=sflag, size = 0x8, scoped, tag = 'scoped memory for tpu_custom_call.1']
    #allocation10 [shape = 'u8[1024]{0}', space=vmem, size = 0x400, scoped, tag = 'output window, operand 0']
    %7 = vsyncpa [#allocation6], 0
    %8 = vsyncpa [#allocation9], 0
    %s9 = scalar_lea.sflag [#allocation9], 1
    %10 = vsyncpa %s9, 0
    %11 = vsyncpa [#allocation7], 0
    %s12 = scalar_lea.sflag [#allocation7], 1
    %13 = vsyncpa %s12, 0
    loop: start=0, step=1, limit=4
    $region2: #{tpu_custom_call.1} parent=1 // loop_pre_header
      _
    $region3: #{tpu_custom_call.1} parent=1 // loop_header
      %s15 = sphi 0, %s19
      %p16 = scmp.ge.s32.totalorder %s15, 4
      %s22 = sphi 0, %s34
      %s23 = sphi 0, %s30
      %s24 = sphi 0, %s22
      %s25 = sphi 0, %s23
      %s26 = sphi 0, %s24
      %s27 = sphi 0, %s25
      %s35 = sphi 0, %s35
      %s37 = sphi 0, %s35
      %s38 = sphi 0, %s37
      %s52 = sphi 0, %s38
      %s60 = sphi 0, %s62
      %s63 = sphi 0, %s60
      %s64 = sphi 0, %s63
      %s80 = sphi 0, %s64
      %s86 = sphi 0, %s88
      %s89 = sphi 0, %s86
      %s90 = sphi 0, %s89
      %s106 = sphi 0, %s90
    $region4: #{tpu_custom_call.1} parent=1 // loop_header_branch
      %18 = sbr.rel (%p16) target = $region8
    $region5: #{tpu_custom_call.1} parent=1 // loop_body
      %s20 = ssub.s32 %s15, 1
      %s21 = ssub.s32 %s15, 2
      %s28 = sadd.s32 1, %s23
      %p29 = scmp.ge.s32.totalorder %s28, 1
      %s30 = scalar_select %p29, 0, %s28
      %s31 = sadd.s32 1, %s22
      %s32 = scalar_select %p29, %s31, %s22
      %p33 = scmp.ge.s32.totalorder %s32, 2
      %s34 = scalar_select %p33, 0, %s32
      %s36 = sadd.s32 %s35, 1
      %p39 = scmp.eq.s32.totalorder %s15, 1
      %p40 = scmp.ne.s32.totalorder %s35, %s37
      %p41 = scmp.eq.s32.totalorder %s15, 0
      %p42 = por %p40, %p41
      %p43 = scmp.ne.s32.totalorder %s35, %s37
      %p44 = scmp.eq.s32.totalorder %s20, 1
      %p45 = por %p43, %p44
      %p46 = scmp.ne.s32.totalorder %s37, %s38
      %p47 = scmp.eq.s32.totalorder %s20, 0
      %p48 = por %p46, %p47
      %p49 = scmp.ne.s32.totalorder %s37, %s38
      %p50 = scmp.eq.s32.totalorder %s21, 1
      %p51 = por %p49, %p50
      %p53 = scmp.ne.s32.totalorder %s38, %s52
      %p54 = scmp.eq.s32.totalorder %s21, 0
      %p55 = por %p53, %p54
      %s56 = ssub.s32 %s22, %s34
      %s57 = ssub.s32 %s23, %s30
      %s58 = sor.u32 %s56, %s57
      %p59 = scmp.eq.s32.totalorder %s58, 0
      %s61 = sadd.s32 %s60, 1
      %s62 = scalar_select %p59, %s60, %s61
      %p65 = pneg %p59
      %p66 = scmp.eq.s32.totalorder %s15, 1
      %p67 = por %p65, %p66
      %p68 = scmp.ne.s32.totalorder %s60, %s63
      %p69 = scmp.eq.s32.totalorder %s15, 0
      %p70 = por %p68, %p69
      %p71 = scmp.ne.s32.totalorder %s60, %s63
      %p72 = scmp.eq.s32.totalorder %s20, 1
      %p73 = por %p71, %p72
      %p74 = scmp.ne.s32.totalorder %s63, %s64
      %p75 = scmp.eq.s32.totalorder %s20, 0
      %p76 = por %p74, %p75
      %p77 = scmp.ne.s32.totalorder %s63, %s64
      %p78 = scmp.eq.s32.totalorder %s21, 1
      %p79 = por %p77, %p78
      %p81 = scmp.ne.s32.totalorder %s64, %s80
      %p82 = scmp.eq.s32.totalorder %s21, 0
      %p83 = por %p81, %p82
      %s84 = ssub.s32 %s22, %s34
      %p85 = scmp.eq.s32.totalorder %s84, 0
      %s87 = sadd.s32 %s86, 1
      %s88 = scalar_select %p85, %s86, %s87
      %p91 = pneg %p85
      %p92 = scmp.eq.s32.totalorder %s15, 1
      %p93 = por %p91, %p92
      %p94 = scmp.ne.s32.totalorder %s86, %s89
      %p95 = scmp.eq.s32.totalorder %s15, 0
      %p96 = por %p94, %p95
      %p97 = scmp.ne.s32.totalorder %s86, %s89
      %p98 = scmp.eq.s32.totalorder %s20, 1
      %p99 = por %p97, %p98
      %p100 = scmp.ne.s32.totalorder %s89, %s90
      %p101 = scmp.eq.s32.totalorder %s20, 0
      %p102 = por %p100, %p101
      %p103 = scmp.ne.s32.totalorder %s89, %s90
      %p104 = scmp.eq.s32.totalorder %s21, 1
      %p105 = por %p103, %p104
      %p107 = scmp.ne.s32.totalorder %s90, %s106
      %p108 = scmp.eq.s32.totalorder %s21, 0
      %p109 = por %p107, %p108
      %p110 = scmp.le.s32.totalorder 1, %s15
      %p111 = scmp.lt.s32.totalorder %s15, 3
      %p112 = pnand %p110, %p111
      %p113 = pneg %p112
      // Predicated region
      $region9: #{tpu_custom_call.1} parent=5 // pred_check
        _
      $region10: #{tpu_custom_call.1} parent=5 // pred_check_branch
        %115 = sbr.rel (%p112) target = $region12
      $region11: #{tpu_custom_call.1} parent=5 // pred_region
        %s116 = ssub.s32 %s15, 1
        // Predicated region
        $region13: #{tpu_custom_call.1} parent=11 // pred_check
          %p117 = pneg %p48
        $region14: #{tpu_custom_call.1} parent=11 // pred_check_branch
          %119 = sbr.rel (%p117) target = $region16
        $region15: #{tpu_custom_call.1} parent=11 // pred_region
          %s121 = ssub.s32 16, 16
          %122 = vsyncadd [#allocation6], %s121
          %s124 = sshll.u32 [#allocation5], 4
          %s125 = int_to_ptr.vmem [resolvable:$true] %s124
          %127 = dma.hbm_to_vmem [thread:$0]  %s0, 16, %s125, [#allocation6]
        $region16: #{tpu_custom_call.1} parent=11 // pred_fallthru
          _
      $region12: #{tpu_custom_call.1} parent=5 // pred_fallthru
        _
      %p128 = scmp.lt.s32.totalorder %s15, 2
      // Predicated region
      $region17: #{tpu_custom_call.1} parent=5 // pred_check
        %p129 = pneg %p128
      $region18: #{tpu_custom_call.1} parent=5 // pred_check_branch
        %131 = sbr.rel (%p129) target = $region20
      $region19: #{tpu_custom_call.1} parent=5 // pred_region
        // Predicated region
        $region21: #{tpu_custom_call.1} parent=19 // pred_check
          %p132 = pneg %p70
        $region22: #{tpu_custom_call.1} parent=19 // pred_check_branch
          %134 = sbr.rel (%p132) target = $region24
        $region23: #{tpu_custom_call.1} parent=19 // pred_region
          %s135 = sand.u32 %s60, 1
          %s136 = scalar_lea.sflag [#allocation9], %s135
          %s137 = sand.u32 %s60, 1
          %s138 = smul.addr %s137, 8
          %s139 = scalar_lea.vmem [#allocation8], %s138
          %s141 = ssub.s32 128, 128
          %142 = vsyncadd %s136, %s141
          %s143 = sadd.s32 %s23, %s22
          %s144 = smul.addr %s143, 128
          %s145 = scalar_lea.hbm %s1, %s144
          %s147 = sshll.u32 %s139, 4
          %s148 = int_to_ptr.vmem [resolvable:$true] %s147
          %150 = dma.hbm_to_vmem [thread:$0]  %s145, 128, %s148, %s136
        $region24: #{tpu_custom_call.1} parent=19 // pred_fallthru
          _
      $region20: #{tpu_custom_call.1} parent=5 // pred_fallthru
        _
      %p151 = scmp.le.s32.totalorder 1, %s15
      %p152 = scmp.lt.s32.totalorder %s15, 3
      %p153 = pnand %p151, %p152
      %p154 = pneg %p153
      // Predicated region
      $region25: #{tpu_custom_call.1} parent=5 // pred_check
        _
      $region26: #{tpu_custom_call.1} parent=5 // pred_check_branch
        %156 = sbr.rel (%p153) target = $region28
      $region27: #{tpu_custom_call.1} parent=5 // pred_region
        %s157 = ssub.s32 %s15, 1
        // Predicated region
        $region29: #{tpu_custom_call.1} parent=27 // pred_check
          %p158 = pneg %p48
        $region30: #{tpu_custom_call.1} parent=27 // pred_check_branch
          %160 = sbr.rel (%p158) target = $region32
        $region31: #{tpu_custom_call.1} parent=27 // pred_region
          %161 = dma.done [#allocation6], 16
        $region32: #{tpu_custom_call.1} parent=27 // pred_fallthru
          _
        %s162 = sand.u32 %s63, 1
        %s163 = scalar_lea.sflag [#allocation9], %s162
        %s164 = sand.u32 %s63, 1
        %s165 = smul.addr %s164, 8
        %s166 = scalar_lea.vmem [#allocation8], %s165
        // Predicated region
        $region33: #{tpu_custom_call.1} parent=27 // pred_check
          %p167 = pneg %p76
        $region34: #{tpu_custom_call.1} parent=27 // pred_check_branch
          %169 = sbr.rel (%p167) target = $region36
        $region35: #{tpu_custom_call.1} parent=27 // pred_region
          %170 = dma.done %s163, 128
        $region36: #{tpu_custom_call.1} parent=27 // pred_fallthru
          _
        %p171 = pneg %p48
        %p172 = pneg %p45
        %s173 = sand.u32 %s63, 1
        %s174 = scalar_lea.sflag [#allocation9], %s173
        %s175 = sand.u32 %s63, 1
        %s176 = smul.addr %s175, 8
        %s177 = scalar_lea.vmem [#allocation8], %s176
        %p178 = pneg %p76
        %p179 = pneg %p73
        %p180 = pneg %p102
        %p181 = pneg %p99
        %s182 = sand.u32 %s89, 1
        %s183 = scalar_lea.sflag [#allocation7], %s182
        %s184 = sand.u32 %s89, 1
        %s185 = scalar_lea.vmem [#allocation10], %s184
        %p186 = scmp.eq.s32.totalorder %s25, 0
        // Predicated region
        $region37: #{tpu_custom_call.1} parent=27 // pred_check
          %p187 = pneg %p186
        $region38: #{tpu_custom_call.1} parent=27 // pred_check_branch
          %189 = sbr.rel (%p187) target = $region40
        $region39: #{tpu_custom_call.1} parent=27 // pred_region
          %190 = vst [vmem:[#allocation2] sm:$0x1] -1e+30
          %191 = vst [vmem:[#allocation3] sm:$0x1] 0.0
          %192 = vst [vmem:[#allocation4] sm:$0x1] 0.0
        $region40: #{tpu_custom_call.1} parent=27 // pred_fallthru
          _
        %v193 = vld [vmem:[%s166] sm:$0xff]
        %v194 = vld [vmem:[#allocation5] sm:$0x1]
        %v196 = vlaneseq
        %v197 = vshrl.u32 %v196, 7
        %v198 = vsub.s32 0, %v197
        %v199 = vrot.slane %v194, %v198
        %v201 = vmul.f32 %v193, %v199
        %v202 = vld [vmem:[#allocation2] sm:$0x1]
        %v203 = vrot.slane %v201, 4
        %v204 = vmax.f32 %v201, %v203
        %v205 = vrot.slane %v204, 2
        %v206 = vmax.f32 %v204, %v205
        %v207 = vrot.slane %v206, 1
        %v208 = vmax.f32 %v206, %v207
        %v209 = vmax.f32 %v202, %v208
        %v210 = vsub.f32 %v202, %v209
        %v211 = vmul.f32 %v210, 1.442695
        %v212 = vpow.pop %v211
        %v214 = vlaneseq
        %v215 = vshrl.u32 %v214, 7
        %v216 = vsub.s32 0, %v215
        %v217 = vrot.slane %v209, %v216
        %v219 = vsub.f32 %v201, %v217
        %v220 = vmul.f32 %v219, 1.442695
        %v221 = vpow.pop %v220
        %v222 = vld [vmem:[#allocation3] sm:$0x1]
        %v223 = vmul.f32 %v212, %v222
        %v224 = vmul.f32 %v193, %v221
        %v225 = vrot.slane %v224, 4
        %v226 = vadd.f32 %v224, %v225
        %v227 = vrot.slane %v226, 2
        %v228 = vadd.f32 %v226, %v227
        %v229 = vrot.slane %v228, 1
        %v230 = vadd.f32 %v228, %v229
        %v231 = vadd.f32 %v223, %v230
        %232 = vst [vmem:[#allocation3] sm:$0x1] %v231
        %v233 = vld [vmem:[#allocation4] sm:$0x1]
        %v234 = vmul.f32 %v212, %v233
        %v235 = vrot.slane %v221, 4
        %v236 = vadd.f32 %v221, %v235
        %v237 = vrot.slane %v236, 2
        %v238 = vadd.f32 %v236, %v237
        %v239 = vrot.slane %v238, 1
        %v240 = vadd.f32 %v238, %v239
        %v241 = vadd.f32 %v234, %v240
        %242 = vst [vmem:[#allocation4] sm:$0x1] %v241
        %243 = vst [vmem:[#allocation2] sm:$0x1] %v209
        // Predicated region
        $region41: #{tpu_custom_call.1} parent=27 // pred_check
          %p244 = pneg %p186
        $region42: #{tpu_custom_call.1} parent=27 // pred_check_branch
          %246 = sbr.rel (%p244) target = $region44
        $region43: #{tpu_custom_call.1} parent=27 // pred_region
          %v247 = vld [vmem:[#allocation4] sm:$0x1]
          %v248 = vrcp.pop %v247
          %v249 = vmul.f32 %v247, %v248
          %v250 = vsub.f32 2.0, %v249
          %v251 = vmul.f32 %v248, %v250
          %v252 = vld [vmem:[#allocation3] sm:$0x1]
          %v253 = vmul.f32 %v252, %v251
          %254 = vst [vmem:[%s185] sm:$0x1] %v253
        $region44: #{tpu_custom_call.1} parent=27 // pred_fallthru
          _
        %s255 = sand.u32 %s89, 1
        %s256 = scalar_lea.sflag [#allocation7], %s255
        %s257 = sand.u32 %s89, 1
        %s258 = scalar_lea.vmem [#allocation10], %s257
        // Predicated region
        $region45: #{tpu_custom_call.1} parent=27 // pred_check
          %p259 = pneg %p99
        $region46: #{tpu_custom_call.1} parent=27 // pred_check_branch
          %261 = sbr.rel (%p259) target = $region48
        $region47: #{tpu_custom_call.1} parent=27 // pred_region
          %s263 = ssub.s32 16, 16
          %264 = vsyncadd %s256, %s263
          %s265 = smul.addr %s24, 16
          %s266 = scalar_lea.hbm %s2, %s265
          %s268 = sshll.u32 %s258, 4
          %s269 = int_to_ptr.vmem [resolvable:$true] %s268
          %271 = dma.vmem_to_hbm [thread:$0]  %s269, 16, %s266, %s256
        $region48: #{tpu_custom_call.1} parent=27 // pred_fallthru
          _
      $region28: #{tpu_custom_call.1} parent=5 // pred_fallthru
        _
      %p272 = scmp.le.s32.totalorder 2, %s15
      // Predicated region
      $region49: #{tpu_custom_call.1} parent=5 // pred_check
        %p273 = pneg %p272
      $region50: #{tpu_custom_call.1} parent=5 // pred_check_branch
        %275 = sbr.rel (%p273) target = $region52
      $region51: #{tpu_custom_call.1} parent=5 // pred_region
        %s276 = ssub.s32 %s15, 2
        // Predicated region
        $region53: #{tpu_custom_call.1} parent=51 // pred_check
          %p277 = pneg %p105
        $region54: #{tpu_custom_call.1} parent=51 // pred_check_branch
          %279 = sbr.rel (%p277) target = $region56
        $region55: #{tpu_custom_call.1} parent=51 // pred_region
          %s280 = sand.u32 %s90, 1
          %s281 = scalar_lea.sflag [#allocation7], %s280
          %s282 = sand.u32 %s90, 1
          %s283 = scalar_lea.vmem [#allocation10], %s282
          %284 = dma.done %s281, 16
        $region56: #{tpu_custom_call.1} parent=51 // pred_fallthru
          _
      $region52: #{tpu_custom_call.1} parent=5 // pred_fallthru
        _
    $region6: #{tpu_custom_call.1} parent=1 // loop_footer
      %s19 = sadd.s32 1, %s15
    $region7: #{tpu_custom_call.1} parent=1 // loop_footer_branch
      %14 = sbr.rel target = $region3
    $region8: #{tpu_custom_call.1} parent=1 // loop_exit
      _
    %285 = vsyncpa [#allocation6], 1
    %s286 = scalar_lea.sflag [#allocation6], 1
    %287 = vsyncpa %s286, 1
    %288 = vsyncpa [#allocation9], 1
    %s289 = scalar_lea.sflag [#allocation9], 1
    %290 = vsyncpa %s289, 1
    %291 = vsyncpa [#allocation7], 1
    %s292 = scalar_lea.sflag [#allocation7], 1
    %293 = vsyncpa %s292, 1

</llo_original>
